<compile_context>
chip_gen: v5e
topology: v5e:2x2
jax: 0.10.0
libtpu: 0.0.40
codegen_flags: <defaults>
</compile_context>

<pallas_src>
import functools

import jax
import jax.numpy as jnp
from jax import lax
from jax.experimental import pallas as pl
from jax.experimental.pallas import tpu as pltpu


def _stack_counter_seq_kernel(x_ref, s0_ref, o_ref, *, unroll):
    """Sequential stack-counter recurrence, entirely in SMEM scalars.

    x_ref : SMEM (T, 2) f32   per-step [push_signal, pop_signal]
    s0_ref: SMEM (2,)   f32   initial [stack_depth, false_pop_count]
    o_ref : SMEM (T, 2) f32   state AFTER each step
    """
    thr = jnp.float32(0.5)
    one = jnp.float32(1.0)
    zero = jnp.float32(0.0)
    T = x_ref.shape[0]

    def step(t, carry):
        sd, fp = carry
        a = x_ref[t, 0]
        b = x_ref[t, 1]
        # Faithful collapse of the PyTorch if/elif chain in StackCounter.forward:
        #   op == 'Push' iff a >= 0.5 and a >= b
        #   op == 'Pop'  iff b >= 0.5 and b >  a
        #   op == 'NoOp' otherwise
        is_push = (a >= thr) & (a >= b)
        is_pop = (b >= thr) & (b > a)
        # Push            -> stack_depth + 1
        # Pop and sd > 0  -> stack_depth - 1
        # Pop and sd == 0 -> false_pop_count + 1
        # NoOp            -> unchanged
        new_sd = jnp.where(
            is_push, sd + one,
            jnp.where(is_pop & (sd > zero), sd - one, sd))
        new_fp = jnp.where(is_pop & (sd == zero), fp + one, fp)
        o_ref[t, 0] = new_sd
        o_ref[t, 1] = new_fp
        return (new_sd, new_fp)

    lax.fori_loop(0, T, step, (s0_ref[0], s0_ref[1]), unroll=unroll)


@jax.jit
def stack_counter_scan(x_seq, init_state):
    """x_seq: (T, 2) f32 signals; init_state: (2,) f32 [stack_depth, false_pop_count].

    Returns the (T, 2) state after every step, computed in a single kernel call.
    """
    x_seq = jnp.asarray(x_seq, jnp.float32).reshape(-1, 2)
    init_state = jnp.asarray(init_state, jnp.float32).reshape(2)
    T = x_seq.shape[0]
    kernel = functools.partial(_stack_counter_seq_kernel, unroll=bool(T <= 32))
    return pl.pallas_call(
        kernel,
        out_shape=jax.ShapeDtypeStruct((T, 2), jnp.float32),
        in_specs=[pl.BlockSpec(memory_space=pltpu.MemorySpace.SMEM),
                  pl.BlockSpec(memory_space=pltpu.MemorySpace.SMEM)],
        out_specs=pl.BlockSpec(memory_space=pltpu.MemorySpace.SMEM),
    )(x_seq, init_state)


class StackCounterNN:
    """JAX/Pallas port of the PyTorch StackCounterNN module (forward only)."""
    # TODO(synk): custom backward (StackCounter.backward) not implemented; forward only.

    def __init__(self):
        self.stack_depth = jnp.float32(0.0)
        self.false_pop_count = jnp.float32(0.0)

    def reset(self):
        self.stack_depth = jnp.float32(0.0)
        self.false_pop_count = jnp.float32(0.0)

    def __call__(self, x, y=None):
        if y is None:
            y = jnp.stack([self.stack_depth, self.false_pop_count])
        x1 = jnp.reshape(jnp.asarray(x, jnp.float32), (1, 2))
        out = stack_counter_scan(x1, y)[0]
        # Mirror the PyTorch module: reset, then carry the new state forward.
        self.reset()
        self.stack_depth = self.stack_depth + out[0]
        self.false_pop_count = self.false_pop_count + out[1]
        return out

    def scan(self, x_seq, y=None):
        """Process a whole (T, 2) sequence of signals in a single kernel call."""
        if y is None:
            y = jnp.stack([self.stack_depth, self.false_pop_count])
        outs = stack_counter_scan(x_seq, y)
        self.reset()
        self.stack_depth = self.stack_depth + outs[-1, 0]
        self.false_pop_count = self.false_pop_count + outs[-1, 1]
        return outs


def _reference_step(x, state):
    """Pure-Python replica of StackCounter.forward for verification."""
    a, b = float(x[0]), float(x[1])
    sd, fp = float(state[0]), float(state[1])
    push, pop, op = 0, 0, "NoOp"
    if a < 0.5:
        push = 0
    elif a >= 0.5 and a < b:
        push, pop, op = 0, 1, "Pop"
    elif a >= 0.5 and a >= b:
        push, pop, op = 1, 0, "Push"
    if b < 0.5:
        pop = 0
    elif b >= 0.5 and b < a:
        pop, push, op = 0, 1, "Push"
    elif b >= 0.5 and b > a:
        pop, push, op = 1, 0, "Pop"
    if push == 0 and pop == 0:
        op = "NoOp"
    out_sd, out_fp = sd, fp
    if op == "Push":
        out_sd = sd + 1
    elif op == "Pop":
        if sd > 0:
            out_sd = sd - 1
        elif sd == 0:
            out_fp = fp + 1
    return out_sd, out_fp


if __name__ == "__main__":
    key = jax.random.PRNGKey(0)
    T = 8
    x_seq = jax.random.uniform(key, (T, 2), dtype=jnp.float32)

    # Whole sequence in ONE kernel call (no per-step launches / host syncs).
    model = StackCounterNN()
    outs = model.scan(x_seq)
    outs = jax.block_until_ready(outs)

    # Host-side replay of StackCounter.forward for verification.
    x_host = jax.device_get(x_seq)
    outs_host = jax.device_get(outs)
    ref_state = (0.0, 0.0)
    ok = True
    for t in range(T):
        ref_state = _reference_step(x_host[t], ref_state)
        if (abs(float(outs_host[t, 0]) - ref_state[0]) > 1e-6 or
                abs(float(outs_host[t, 1]) - ref_state[1]) > 1e-6):
            ok = False
            print(f"mismatch at step {t}: kernel={outs_host[t]} ref={ref_state}")

    # Single-step module path (same kernel with T == 1).
    model2 = StackCounterNN()
    single = jax.block_until_ready(model2(x_host[0]))
    ref_single = _reference_step(x_host[0], (0.0, 0.0))
    if (abs(float(single[0]) - ref_single[0]) > 1e-6 or
            abs(float(single[1]) - ref_single[1]) > 1e-6):
        ok = False
        print(f"single-step mismatch: kernel={single} ref={ref_single}")

    if ok:
        print("KERNEL_OK")
</pallas_src>

<mosaic_0001>
module attributes {stable_mosaic.version = 11 : i64} {
  func.func @_stack_counter_seq_kernel(%arg0: memref<8x2xf32, #tpu.memory_space<smem>>, %arg1: memref<2xf32, #tpu.memory_space<smem>>, %arg2: memref<8x2xf32, #tpu.memory_space<smem>>) attributes {dimension_semantics = [], scalar_prefetch = 0 : i64, scratch_operands = 0 : i64, tpu.core_type = #tpu.core_type<tc>} {
    %c0 = arith.constant 0 : index
    %0 = memref.load %arg1[%c0] : memref<2xf32, #tpu.memory_space<smem>>
    %c1 = arith.constant 1 : index
    %1 = memref.load %arg1[%c1] : memref<2xf32, #tpu.memory_space<smem>>
    %cst = arith.constant 5.000000e-01 : f32
    %cst_0 = arith.constant 1.000000e+00 : f32
    %cst_1 = arith.constant 0.000000e+00 : f32
    %c0_i32 = arith.constant 0 : i32
    %2 = arith.index_cast %c0_i32 : i32 to index
    %c0_2 = arith.constant 0 : index
    %3 = memref.load %arg0[%2, %c0_2] : memref<8x2xf32, #tpu.memory_space<smem>>
    %4 = arith.index_cast %c0_i32 : i32 to index
    %c1_3 = arith.constant 1 : index
    %5 = memref.load %arg0[%4, %c1_3] : memref<8x2xf32, #tpu.memory_space<smem>>
    %6 = arith.cmpf oge, %3, %cst : f32
    %7 = arith.cmpf oge, %3, %5 : f32
    %8 = arith.andi %6, %7 : i1
    %9 = arith.cmpf oge, %5, %cst : f32
    %10 = arith.cmpf ogt, %5, %3 : f32
    %11 = arith.andi %9, %10 : i1
    %12 = arith.addf %0, %cst_0 : f32
    %13 = arith.cmpf ogt, %0, %cst_1 : f32
    %14 = arith.andi %11, %13 : i1
    %15 = arith.subf %0, %cst_0 : f32
    %16 = arith.select %14, %15, %0 : f32
    %17 = arith.select %8, %12, %16 : f32
    %18 = arith.cmpf oeq, %0, %cst_1 : f32
    %19 = arith.andi %11, %18 : i1
    %20 = arith.addf %1, %cst_0 : f32
    %21 = arith.select %19, %20, %1 : f32
    %22 = arith.index_cast %c0_i32 : i32 to index
    %c0_4 = arith.constant 0 : index
    %23 = memref.load %arg2[%22, %c0_4] : memref<8x2xf32, #tpu.memory_space<smem>>
    memref.store %17, %arg2[%22, %c0_4] : memref<8x2xf32, #tpu.memory_space<smem>>
    %24 = arith.index_cast %c0_i32 : i32 to index
    %c1_5 = arith.constant 1 : index
    %25 = memref.load %arg2[%24, %c1_5] : memref<8x2xf32, #tpu.memory_space<smem>>
    memref.store %21, %arg2[%24, %c1_5] : memref<8x2xf32, #tpu.memory_space<smem>>
    %c1_i32 = arith.constant 1 : i32
    %26 = arith.index_cast %c1_i32 : i32 to index
    %c0_6 = arith.constant 0 : index
    %27 = memref.load %arg0[%26, %c0_6] : memref<8x2xf32, #tpu.memory_space<smem>>
    %28 = arith.index_cast %c1_i32 : i32 to index
    %c1_7 = arith.constant 1 : index
    %29 = memref.load %arg0[%28, %c1_7] : memref<8x2xf32, #tpu.memory_space<smem>>
    %30 = arith.cmpf oge, %27, %cst : f32
    %31 = arith.cmpf oge, %27, %29 : f32
    %32 = arith.andi %30, %31 : i1
    %33 = arith.cmpf oge, %29, %cst : f32
    %34 = arith.cmpf ogt, %29, %27 : f32
    %35 = arith.andi %33, %34 : i1
    %36 = arith.addf %17, %cst_0 : f32
    %37 = arith.cmpf ogt, %17, %cst_1 : f32
    %38 = arith.andi %35, %37 : i1
    %39 = arith.subf %17, %cst_0 : f32
    %40 = arith.select %38, %39, %17 : f32
    %41 = arith.select %32, %36, %40 : f32
    %42 = arith.cmpf oeq, %17, %cst_1 : f32
    %43 = arith.andi %35, %42 : i1
    %44 = arith.addf %21, %cst_0 : f32
    %45 = arith.select %43, %44, %21 : f32
    %46 = arith.index_cast %c1_i32 : i32 to index
    %c0_8 = arith.constant 0 : index
    %47 = memref.load %arg2[%46, %c0_8] : memref<8x2xf32, #tpu.memory_space<smem>>
    memref.store %41, %arg2[%46, %c0_8] : memref<8x2xf32, #tpu.memory_space<smem>>
    %48 = arith.index_cast %c1_i32 : i32 to index
    %c1_9 = arith.constant 1 : index
    %49 = memref.load %arg2[%48, %c1_9] : memref<8x2xf32, #tpu.memory_space<smem>>
    memref.store %45, %arg2[%48, %c1_9] : memref<8x2xf32, #tpu.memory_space<smem>>
    %c2_i32 = arith.constant 2 : i32
    %50 = arith.index_cast %c2_i32 : i32 to index
    %c0_10 = arith.constant 0 : index
    %51 = memref.load %arg0[%50, %c0_10] : memref<8x2xf32, #tpu.memory_space<smem>>
    %52 = arith.index_cast %c2_i32 : i32 to index
    %c1_11 = arith.constant 1 : index
    %53 = memref.load %arg0[%52, %c1_11] : memref<8x2xf32, #tpu.memory_space<smem>>
    %54 = arith.cmpf oge, %51, %cst : f32
    %55 = arith.cmpf oge, %51, %53 : f32
    %56 = arith.andi %54, %55 : i1
    %57 = arith.cmpf oge, %53, %cst : f32
    %58 = arith.cmpf ogt, %53, %51 : f32
    %59 = arith.andi %57, %58 : i1
    %60 = arith.addf %41, %cst_0 : f32
    %61 = arith.cmpf ogt, %41, %cst_1 : f32
    %62 = arith.andi %59, %61 : i1
    %63 = arith.subf %41, %cst_0 : f32
    %64 = arith.select %62, %63, %41 : f32
    %65 = arith.select %56, %60, %64 : f32
    %66 = arith.cmpf oeq, %41, %cst_1 : f32
    %67 = arith.andi %59, %66 : i1
    %68 = arith.addf %45, %cst_0 : f32
    %69 = arith.select %67, %68, %45 : f32
    %70 = arith.index_cast %c2_i32 : i32 to index
    %c0_12 = arith.constant 0 : index
    %71 = memref.load %arg2[%70, %c0_12] : memref<8x2xf32, #tpu.memory_space<smem>>
    memref.store %65, %arg2[%70, %c0_12] : memref<8x2xf32, #tpu.memory_space<smem>>
    %72 = arith.index_cast %c2_i32 : i32 to index
    %c1_13 = arith.constant 1 : index
    %73 = memref.load %arg2[%72, %c1_13] : memref<8x2xf32, #tpu.memory_space<smem>>
    memref.store %69, %arg2[%72, %c1_13] : memref<8x2xf32, #tpu.memory_space<smem>>
    %c3_i32 = arith.constant 3 : i32
    %74 = arith.index_cast %c3_i32 : i32 to index
    %c0_14 = arith.constant 0 : index
    %75 = memref.load %arg0[%74, %c0_14] : memref<8x2xf32, #tpu.memory_space<smem>>
    %76 = arith.index_cast %c3_i32 : i32 to index
    %c1_15 = arith.constant 1 : index
    %77 = memref.load %arg0[%76, %c1_15] : memref<8x2xf32, #tpu.memory_space<smem>>
    %78 = arith.cmpf oge, %75, %cst : f32
    %79 = arith.cmpf oge, %75, %77 : f32
    %80 = arith.andi %78, %79 : i1
    %81 = arith.cmpf oge, %77, %cst : f32
    %82 = arith.cmpf ogt, %77, %75 : f32
    %83 = arith.andi %81, %82 : i1
    %84 = arith.addf %65, %cst_0 : f32
    %85 = arith.cmpf ogt, %65, %cst_1 : f32
    %86 = arith.andi %83, %85 : i1
    %87 = arith.subf %65, %cst_0 : f32
    %88 = arith.select %86, %87, %65 : f32
    %89 = arith.select %80, %84, %88 : f32
    %90 = arith.cmpf oeq, %65, %cst_1 : f32
    %91 = arith.andi %83, %90 : i1
    %92 = arith.addf %69, %cst_0 : f32
    %93 = arith.select %91, %92, %69 : f32
    %94 = arith.index_cast %c3_i32 : i32 to index
    %c0_16 = arith.constant 0 : index
    %95 = memref.load %arg2[%94, %c0_16] : memref<8x2xf32, #tpu.memory_space<smem>>
    memref.store %89, %arg2[%94, %c0_16] : memref<8x2xf32, #tpu.memory_space<smem>>
    %96 = arith.index_cast %c3_i32 : i32 to index
    %c1_17 = arith.constant 1 : index
    %97 = memref.load %arg2[%96, %c1_17] : memref<8x2xf32, #tpu.memory_space<smem>>
    memref.store %93, %arg2[%96, %c1_17] : memref<8x2xf32, #tpu.memory_space<smem>>
    %c4_i32 = arith.constant 4 : i32
    %98 = arith.index_cast %c4_i32 : i32 to index
    %c0_18 = arith.constant 0 : index
    %99 = memref.load %arg0[%98, %c0_18] : memref<8x2xf32, #tpu.memory_space<smem>>
    %100 = arith.index_cast %c4_i32 : i32 to index
    %c1_19 = arith.constant 1 : index
    %101 = memref.load %arg0[%100, %c1_19] : memref<8x2xf32, #tpu.memory_space<smem>>
    %102 = arith.cmpf oge, %99, %cst : f32
    %103 = arith.cmpf oge, %99, %101 : f32
    %104 = arith.andi %102, %103 : i1
    %105 = arith.cmpf oge, %101, %cst : f32
    %106 = arith.cmpf ogt, %101, %99 : f32
    %107 = arith.andi %105, %106 : i1
    %108 = arith.addf %89, %cst_0 : f32
    %109 = arith.cmpf ogt, %89, %cst_1 : f32
    %110 = arith.andi %107, %109 : i1
    %111 = arith.subf %89, %cst_0 : f32
    %112 = arith.select %110, %111, %89 : f32
    %113 = arith.select %104, %108, %112 : f32
    %114 = arith.cmpf oeq, %89, %cst_1 : f32
    %115 = arith.andi %107, %114 : i1
    %116 = arith.addf %93, %cst_0 : f32
    %117 = arith.select %115, %116, %93 : f32
    %118 = arith.index_cast %c4_i32 : i32 to index
    %c0_20 = arith.constant 0 : index
    %119 = memref.load %arg2[%118, %c0_20] : memref<8x2xf32, #tpu.memory_space<smem>>
    memref.store %113, %arg2[%118, %c0_20] : memref<8x2xf32, #tpu.memory_space<smem>>
    %120 = arith.index_cast %c4_i32 : i32 to index
    %c1_21 = arith.constant 1 : index
    %121 = memref.load %arg2[%120, %c1_21] : memref<8x2xf32, #tpu.memory_space<smem>>
    memref.store %117, %arg2[%120, %c1_21] : memref<8x2xf32, #tpu.memory_space<smem>>
    %c5_i32 = arith.constant 5 : i32
    %122 = arith.index_cast %c5_i32 : i32 to index
    %c0_22 = arith.constant 0 : index
    %123 = memref.load %arg0[%122, %c0_22] : memref<8x2xf32, #tpu.memory_space<smem>>
    %124 = arith.index_cast %c5_i32 : i32 to index
    %c1_23 = arith.constant 1 : index
    %125 = memref.load %arg0[%124, %c1_23] : memref<8x2xf32, #tpu.memory_space<smem>>
    %126 = arith.cmpf oge, %123, %cst : f32
    %127 = arith.cmpf oge, %123, %125 : f32
    %128 = arith.andi %126, %127 : i1
    %129 = arith.cmpf oge, %125, %cst : f32
    %130 = arith.cmpf ogt, %125, %123 : f32
    %131 = arith.andi %129, %130 : i1
    %132 = arith.addf %113, %cst_0 : f32
    %133 = arith.cmpf ogt, %113, %cst_1 : f32
    %134 = arith.andi %131, %133 : i1
    %135 = arith.subf %113, %cst_0 : f32
    %136 = arith.select %134, %135, %113 : f32
    %137 = arith.select %128, %132, %136 : f32
    %138 = arith.cmpf oeq, %113, %cst_1 : f32
    %139 = arith.andi %131, %138 : i1
    %140 = arith.addf %117, %cst_0 : f32
    %141 = arith.select %139, %140, %117 : f32
    %142 = arith.index_cast %c5_i32 : i32 to index
    %c0_24 = arith.constant 0 : index
    %143 = memref.load %arg2[%142, %c0_24] : memref<8x2xf32, #tpu.memory_space<smem>>
    memref.store %137, %arg2[%142, %c0_24] : memref<8x2xf32, #tpu.memory_space<smem>>
    %144 = arith.index_cast %c5_i32 : i32 to index
    %c1_25 = arith.constant 1 : index
    %145 = memref.load %arg2[%144, %c1_25] : memref<8x2xf32, #tpu.memory_space<smem>>
    memref.store %141, %arg2[%144, %c1_25] : memref<8x2xf32, #tpu.memory_space<smem>>
    %c6_i32 = arith.constant 6 : i32
    %146 = arith.index_cast %c6_i32 : i32 to index
    %c0_26 = arith.constant 0 : index
    %147 = memref.load %arg0[%146, %c0_26] : memref<8x2xf32, #tpu.memory_space<smem>>
    %148 = arith.index_cast %c6_i32 : i32 to index
    %c1_27 = arith.constant 1 : index
    %149 = memref.load %arg0[%148, %c1_27] : memref<8x2xf32, #tpu.memory_space<smem>>
    %150 = arith.cmpf oge, %147, %cst : f32
    %151 = arith.cmpf oge, %147, %149 : f32
    %152 = arith.andi %150, %151 : i1
    %153 = arith.cmpf oge, %149, %cst : f32
    %154 = arith.cmpf ogt, %149, %147 : f32
    %155 = arith.andi %153, %154 : i1
    %156 = arith.addf %137, %cst_0 : f32
    %157 = arith.cmpf ogt, %137, %cst_1 : f32
    %158 = arith.andi %155, %157 : i1
    %159 = arith.subf %137, %cst_0 : f32
    %160 = arith.select %158, %159, %137 : f32
    %161 = arith.select %152, %156, %160 : f32
    %162 = arith.cmpf oeq, %137, %cst_1 : f32
    %163 = arith.andi %155, %162 : i1
    %164 = arith.addf %141, %cst_0 : f32
    %165 = arith.select %163, %164, %141 : f32
    %166 = arith.index_cast %c6_i32 : i32 to index
    %c0_28 = arith.constant 0 : index
    %167 = memref.load %arg2[%166, %c0_28] : memref<8x2xf32, #tpu.memory_space<smem>>
    memref.store %161, %arg2[%166, %c0_28] : memref<8x2xf32, #tpu.memory_space<smem>>
    %168 = arith.index_cast %c6_i32 : i32 to index
    %c1_29 = arith.constant 1 : index
    %169 = memref.load %arg2[%168, %c1_29] : memref<8x2xf32, #tpu.memory_space<smem>>
    memref.store %165, %arg2[%168, %c1_29] : memref<8x2xf32, #tpu.memory_space<smem>>
    %c7_i32 = arith.constant 7 : i32
    %170 = arith.index_cast %c7_i32 : i32 to index
    %c0_30 = arith.constant 0 : index
    %171 = memref.load %arg0[%170, %c0_30] : memref<8x2xf32, #tpu.memory_space<smem>>
    %172 = arith.index_cast %c7_i32 : i32 to index
    %c1_31 = arith.constant 1 : index
    %173 = memref.load %arg0[%172, %c1_31] : memref<8x2xf32, #tpu.memory_space<smem>>
    %174 = arith.cmpf oge, %171, %cst : f32
    %175 = arith.cmpf oge, %171, %173 : f32
    %176 = arith.andi %174, %175 : i1
    %177 = arith.cmpf oge, %173, %cst : f32
    %178 = arith.cmpf ogt, %173, %171 : f32
    %179 = arith.andi %177, %178 : i1
    %180 = arith.addf %161, %cst_0 : f32
    %181 = arith.cmpf ogt, %161, %cst_1 : f32
    %182 = arith.andi %179, %181 : i1
    %183 = arith.subf %161, %cst_0 : f32
    %184 = arith.select %182, %183, %161 : f32
    %185 = arith.select %176, %180, %184 : f32
    %186 = arith.cmpf oeq, %161, %cst_1 : f32
    %187 = arith.andi %179, %186 : i1
    %188 = arith.addf %165, %cst_0 : f32
    %189 = arith.select %187, %188, %165 : f32
    %190 = arith.index_cast %c7_i32 : i32 to index
    %c0_32 = arith.constant 0 : index
    %191 = memref.load %arg2[%190, %c0_32] : memref<8x2xf32, #tpu.memory_space<smem>>
    memref.store %185, %arg2[%190, %c0_32] : memref<8x2xf32, #tpu.memory_space<smem>>
    %192 = arith.index_cast %c7_i32 : i32 to index
    %c1_33 = arith.constant 1 : index
    %193 = memref.load %arg2[%192, %c1_33] : memref<8x2xf32, #tpu.memory_space<smem>>
    memref.store %189, %arg2[%192, %c1_33] : memref<8x2xf32, #tpu.memory_space<smem>>
    %c8_i32 = arith.constant 8 : i32
    return
  }
}

</mosaic_0001>

<llo_original>
// kernel: stack_counter_scan.1
$region0: #{stack_counter_scan.1}
  #allocation0 [shape = 'u32[]', space=smem, size = 0x4, offset = 0x4, fixed_abs, tag = 'smem constant byte address 0x4 - core index']
  #allocation1 [shape = 'u32[72,128]{1,0:T(1,128)}', space=vmem, size = 0x9000, scoped, tag = 'internal scratch']
  %s0 = inlined_call_operand.vmem [shape: f32[8,2], index: 0, kind: input, shape index: {}]
  %s1 = inlined_call_operand.vmem [shape: f32[2], index: 1, kind: input, shape index: {}]
  %s2 = inlined_call_operand.vmem [shape: f32[8,2], index: 2, kind: output, shape index: {}]
  %s3 = sld [smem:[#allocation0]]
  $region26: #{stack_counter_scan.1} parent=0
    _
  %s5 = ssub.s32 1, %s3
  %s6 = scalar_select 0, %s5, %s3
  $region1: #{stack_counter_scan.1} parent=0
    #allocation2 [shape = 'u8[4096]{0}', space=smem, size = 0x1000, scoped, tag = 'input window, operand 0, single buffered']
    #allocation3 [shape = 's32[1]{0}', space=sflag, size = 0x4, scoped, tag = 'scoped memory for stack_counter_scan.1']
    #allocation4 [shape = 's32[1]{0}', space=sflag, size = 0x4, scoped, tag = 'scoped memory for stack_counter_scan.1']
    #allocation5 [shape = 'u8[512]{0}', space=smem, size = 0x200, scoped, tag = 'input window, operand 1, single buffered']
    #allocation6 [shape = 's32[1]{0}', space=sflag, size = 0x4, scoped, tag = 'scoped memory for stack_counter_scan.1']
    #allocation7 [shape = 'u8[4096]{0}', space=smem, size = 0x1000, scoped, tag = 'output window, operand 0, single buffered']
    %7 = vsyncpa [#allocation3], 0
    %8 = vsyncpa [#allocation6], 0
    %9 = vsyncpa [#allocation4], 0
    // Predicated region
    $region2: #{stack_counter_scan.1} parent=1 // pred_check
      _
    $region3: #{stack_counter_scan.1} parent=1 // pred_check_branch
      %11 = sbr.rel (0) target = $region5
    $region4: #{stack_counter_scan.1} parent=1 // pred_region
      %13 = vsyncadd [#allocation3], 0
      %s15 = sshll.u32 %s0, 4
      %s16 = int_to_ptr.vmem [resolvable:$true] %s15
      %18 = dma.vmem_to_smem %s16, 128, [#allocation2], [#allocation3]
    $region5: #{stack_counter_scan.1} parent=1 // pred_fallthru
      _
    // Predicated region
    $region6: #{stack_counter_scan.1} parent=1 // pred_check
      _
    $region7: #{stack_counter_scan.1} parent=1 // pred_check_branch
      %20 = sbr.rel (0) target = $region9
    $region8: #{stack_counter_scan.1} parent=1 // pred_region
      %22 = vsyncadd [#allocation6], 0
      %s24 = sshll.u32 %s1, 4
      %s25 = int_to_ptr.vmem [resolvable:$true] %s24
      %27 = dma.vmem_to_smem %s25, 16, [#allocation5], [#allocation6]
    $region9: #{stack_counter_scan.1} parent=1 // pred_fallthru
      _
    // Predicated region
    $region10: #{stack_counter_scan.1} parent=1 // pred_check
      _
    $region11: #{stack_counter_scan.1} parent=1 // pred_check_branch
      %29 = sbr.rel (0) target = $region13
    $region12: #{stack_counter_scan.1} parent=1 // pred_region
      %31 = dma.done [#allocation3], 128
    $region13: #{stack_counter_scan.1} parent=1 // pred_fallthru
      _
    // Predicated region
    $region14: #{stack_counter_scan.1} parent=1 // pred_check
      _
    $region15: #{stack_counter_scan.1} parent=1 // pred_check_branch
      %33 = sbr.rel (0) target = $region17
    $region16: #{stack_counter_scan.1} parent=1 // pred_region
      %35 = dma.done [#allocation6], 16
    $region17: #{stack_counter_scan.1} parent=1 // pred_fallthru
      _
    %36 = sfence
    %s37 = sld [smem:[#allocation5]]
    %s38 = sld [smem:[#allocation5 + $0x1]]
    %s39 = sld [smem:[#allocation2]]
    %s40 = sld [smem:[#allocation2 + $0x1]]
    %p41 = scmp.ge.f32.partialorder %s39, 0.5
    %p42 = scmp.ge.f32.partialorder %s39, %s40
    %p43 = pnand %p41, %p42
    %p44 = pneg %p43
    %p45 = scmp.ge.f32.partialorder %s40, 0.5
    %p46 = scmp.gt.f32.partialorder %s40, %s39
    %p47 = pnand %p45, %p46
    %p48 = pneg %p47
    %s49 = sadd.f32 %s37, 1.0
    %p50 = scmp.gt.f32.partialorder %s37, 0.0
    %p51 = pnand %p48, %p50
    %p52 = pneg %p51
    %s53 = ssub.f32 %s37, 1.0
    %s54 = scalar_select %p52, %s53, %s37
    %s55 = scalar_select %p44, %s49, %s54
    %p56 = scmp.eq.f32.partialorder %s37, 0.0
    %p57 = pnand %p48, %p56
    %p58 = pneg %p57
    %s59 = sadd.f32 %s38, 1.0
    %s60 = scalar_select %p58, %s59, %s38
    %s61 = scalar_lea.smem [#allocation7], 0
    %62 = sst [smem:[%s61]] %s55
    %s63 = scalar_lea.smem [#allocation7], 1
    %64 = sst [smem:[%s63]] %s60
    %s65 = sld [smem:[#allocation2 + $0x80]]
    %s66 = sld [smem:[#allocation2 + $0x81]]
    %p67 = scmp.ge.f32.partialorder %s65, 0.5
    %p68 = scmp.ge.f32.partialorder %s65, %s66
    %p69 = pnand %p67, %p68
    %p70 = pneg %p69
    %p71 = scmp.ge.f32.partialorder %s66, 0.5
    %p72 = scmp.gt.f32.partialorder %s66, %s65
    %p73 = pnand %p71, %p72
    %p74 = pneg %p73
    %s75 = sadd.f32 %s55, 1.0
    %p76 = scmp.gt.f32.partialorder %s55, 0.0
    %p77 = pnand %p74, %p76
    %p78 = pneg %p77
    %s79 = ssub.f32 %s55, 1.0
    %s80 = scalar_select %p78, %s79, %s55
    %s81 = scalar_select %p70, %s75, %s80
    %p82 = scmp.eq.f32.partialorder %s55, 0.0
    %p83 = pnand %p74, %p82
    %p84 = pneg %p83
    %s85 = sadd.f32 %s60, 1.0
    %s86 = scalar_select %p84, %s85, %s60
    %s87 = scalar_lea.smem [#allocation7], 128
    %88 = sst [smem:[%s87]] %s81
    %s89 = scalar_lea.smem [#allocation7], 129
    %90 = sst [smem:[%s89]] %s86
    %s91 = sld [smem:[#allocation2 + $0x100]]
    %s92 = sld [smem:[#allocation2 + $0x101]]
    %p93 = scmp.ge.f32.partialorder %s91, 0.5
    %p94 = scmp.ge.f32.partialorder %s91, %s92
    %p95 = pnand %p93, %p94
    %p96 = pneg %p95
    %p97 = scmp.ge.f32.partialorder %s92, 0.5
    %p98 = scmp.gt.f32.partialorder %s92, %s91
    %p99 = pnand %p97, %p98
    %p100 = pneg %p99
    %s101 = sadd.f32 %s81, 1.0
    %p102 = scmp.gt.f32.partialorder %s81, 0.0
    %p103 = pnand %p100, %p102
    %p104 = pneg %p103
    %s105 = ssub.f32 %s81, 1.0
    %s106 = scalar_select %p104, %s105, %s81
    %s107 = scalar_select %p96, %s101, %s106
    %p108 = scmp.eq.f32.partialorder %s81, 0.0
    %p109 = pnand %p100, %p108
    %p110 = pneg %p109
    %s111 = sadd.f32 %s86, 1.0
    %s112 = scalar_select %p110, %s111, %s86
    %s113 = scalar_lea.smem [#allocation7], 256
    %114 = sst [smem:[%s113]] %s107
    %s115 = scalar_lea.smem [#allocation7], 257
    %116 = sst [smem:[%s115]] %s112
    %s117 = sld [smem:[#allocation2 + $0x180]]
    %s118 = sld [smem:[#allocation2 + $0x181]]
    %p119 = scmp.ge.f32.partialorder %s117, 0.5
    %p120 = scmp.ge.f32.partialorder %s117, %s118
    %p121 = pnand %p119, %p120
    %p122 = pneg %p121
    %p123 = scmp.ge.f32.partialorder %s118, 0.5
    %p124 = scmp.gt.f32.partialorder %s118, %s117
    %p125 = pnand %p123, %p124
    %p126 = pneg %p125
    %s127 = sadd.f32 %s107, 1.0
    %p128 = scmp.gt.f32.partialorder %s107, 0.0
    %p129 = pnand %p126, %p128
    %p130 = pneg %p129
    %s131 = ssub.f32 %s107, 1.0
    %s132 = scalar_select %p130, %s131, %s107
    %s133 = scalar_select %p122, %s127, %s132
    %p134 = scmp.eq.f32.partialorder %s107, 0.0
    %p135 = pnand %p126, %p134
    %p136 = pneg %p135
    %s137 = sadd.f32 %s112, 1.0
    %s138 = scalar_select %p136, %s137, %s112
    %s139 = scalar_lea.smem [#allocation7], 384
    %140 = sst [smem:[%s139]] %s133
    %s141 = scalar_lea.smem [#allocation7], 385
    %142 = sst [smem:[%s141]] %s138
    %s143 = sld [smem:[#allocation2 + $0x200]]
    %s144 = sld [smem:[#allocation2 + $0x201]]
    %p145 = scmp.ge.f32.partialorder %s143, 0.5
    %p146 = scmp.ge.f32.partialorder %s143, %s144
    %p147 = pnand %p145, %p146
    %p148 = pneg %p147
    %p149 = scmp.ge.f32.partialorder %s144, 0.5
    %p150 = scmp.gt.f32.partialorder %s144, %s143
    %p151 = pnand %p149, %p150
    %p152 = pneg %p151
    %s153 = sadd.f32 %s133, 1.0
    %p154 = scmp.gt.f32.partialorder %s133, 0.0
    %p155 = pnand %p152, %p154
    %p156 = pneg %p155
    %s157 = ssub.f32 %s133, 1.0
    %s158 = scalar_select %p156, %s157, %s133
    %s159 = scalar_select %p148, %s153, %s158
    %p160 = scmp.eq.f32.partialorder %s133, 0.0
    %p161 = pnand %p152, %p160
    %p162 = pneg %p161
    %s163 = sadd.f32 %s138, 1.0
    %s164 = scalar_select %p162, %s163, %s138
    %s165 = scalar_lea.smem [#allocation7], 512
    %166 = sst [smem:[%s165]] %s159
    %s167 = scalar_lea.smem [#allocation7], 513
    %168 = sst [smem:[%s167]] %s164
    %s169 = sld [smem:[#allocation2 + $0x280]]
    %s170 = sld [smem:[#allocation2 + $0x281]]
    %p171 = scmp.ge.f32.partialorder %s169, 0.5
    %p172 = scmp.ge.f32.partialorder %s169, %s170
    %p173 = pnand %p171, %p172
    %p174 = pneg %p173
    %p175 = scmp.ge.f32.partialorder %s170, 0.5
    %p176 = scmp.gt.f32.partialorder %s170, %s169
    %p177 = pnand %p175, %p176
    %p178 = pneg %p177
    %s179 = sadd.f32 %s159, 1.0
    %p180 = scmp.gt.f32.partialorder %s159, 0.0
    %p181 = pnand %p178, %p180
    %p182 = pneg %p181
    %s183 = ssub.f32 %s159, 1.0
    %s184 = scalar_select %p182, %s183, %s159
    %s185 = scalar_select %p174, %s179, %s184
    %p186 = scmp.eq.f32.partialorder %s159, 0.0
    %p187 = pnand %p178, %p186
    %p188 = pneg %p187
    %s189 = sadd.f32 %s164, 1.0
    %s190 = scalar_select %p188, %s189, %s164
    %s191 = scalar_lea.smem [#allocation7], 640
    %192 = sst [smem:[%s191]] %s185
    %s193 = scalar_lea.smem [#allocation7], 641
    %194 = sst [smem:[%s193]] %s190
    %s195 = sld [smem:[#allocation2 + $0x300]]
    %s196 = sld [smem:[#allocation2 + $0x301]]
    %p197 = scmp.ge.f32.partialorder %s195, 0.5
    %p198 = scmp.ge.f32.partialorder %s195, %s196
    %p199 = pnand %p197, %p198
    %p200 = pneg %p199
    %p201 = scmp.ge.f32.partialorder %s196, 0.5
    %p202 = scmp.gt.f32.partialorder %s196, %s195
    %p203 = pnand %p201, %p202
    %p204 = pneg %p203
    %s205 = sadd.f32 %s185, 1.0
    %p206 = scmp.gt.f32.partialorder %s185, 0.0
    %p207 = pnand %p204, %p206
    %p208 = pneg %p207
    %s209 = ssub.f32 %s185, 1.0
    %s210 = scalar_select %p208, %s209, %s185
    %s211 = scalar_select %p200, %s205, %s210
    %p212 = scmp.eq.f32.partialorder %s185, 0.0
    %p213 = pnand %p204, %p212
    %p214 = pneg %p213
    %s215 = sadd.f32 %s190, 1.0
    %s216 = scalar_select %p214, %s215, %s190
    %s217 = scalar_lea.smem [#allocation7], 768
    %218 = sst [smem:[%s217]] %s211
    %s219 = scalar_lea.smem [#allocation7], 769
    %220 = sst [smem:[%s219]] %s216
    %s221 = sld [smem:[#allocation2 + $0x380]]
    %s222 = sld [smem:[#allocation2 + $0x381]]
    %p223 = scmp.ge.f32.partialorder %s221, 0.5
    %p224 = scmp.ge.f32.partialorder %s221, %s222
    %p225 = pnand %p223, %p224
    %p226 = pneg %p225
    %p227 = scmp.ge.f32.partialorder %s222, 0.5
    %p228 = scmp.gt.f32.partialorder %s222, %s221
    %p229 = pnand %p227, %p228
    %p230 = pneg %p229
    %s231 = sadd.f32 %s211, 1.0
    %p232 = scmp.gt.f32.partialorder %s211, 0.0
    %p233 = pnand %p230, %p232
    %p234 = pneg %p233
    %s235 = ssub.f32 %s211, 1.0
    %s236 = scalar_select %p234, %s235, %s211
    %s237 = scalar_select %p226, %s231, %s236
    %p238 = scmp.eq.f32.partialorder %s211, 0.0
    %p239 = pnand %p230, %p238
    %p240 = pneg %p239
    %s241 = sadd.f32 %s216, 1.0
    %s242 = scalar_select %p240, %s241, %s216
    %s243 = scalar_lea.smem [#allocation7], 896
    %244 = sst [smem:[%s243]] %s237
    %s245 = scalar_lea.smem [#allocation7], 897
    %246 = sst [smem:[%s245]] %s242
    // Predicated region
    $region18: #{stack_counter_scan.1} parent=1 // pred_check
      _
    $region19: #{stack_counter_scan.1} parent=1 // pred_check_branch
      %248 = sbr.rel (0) target = $region21
    $region20: #{stack_counter_scan.1} parent=1 // pred_region
      %250 = vsyncadd [#allocation4], 0
      %s252 = sshll.u32 %s2, 4
      %s253 = int_to_ptr.vmem [resolvable:$true] %s252
      %255 = dma.smem_to_vmem [#allocation7], 128, %s253, [#allocation4]
    $region21: #{stack_counter_scan.1} parent=1 // pred_fallthru
      _
    // Predicated region
    $region22: #{stack_counter_scan.1} parent=1 // pred_check
      _
    $region23: #{stack_counter_scan.1} parent=1 // pred_check_branch
      %257 = sbr.rel (0) target = $region25
    $region24: #{stack_counter_scan.1} parent=1 // pred_region
      %259 = dma.done [#allocation4], 128
    $region25: #{stack_counter_scan.1} parent=1 // pred_fallthru
      _
    %260 = sfence
    %261 = vsyncpa [#allocation3], 1
    %262 = vsyncpa [#allocation6], 1
    %263 = vsyncpa [#allocation4], 1

</llo_original>
